<compile_context>
chip_gen: v5e
topology: v5e:2x2
jax: 0.10.0
libtpu: 0.0.40
codegen_flags: <defaults>
</compile_context>

<pallas_src>
import math

import jax
import jax.numpy as jnp
from jax.experimental import pallas as pl
from jax.experimental.pallas import tpu as pltpu


def _round_up(x, m):
    return ((x + m - 1) // m) * m


def _vmem_capacity_bytes():
    try:
        return int(pltpu.get_tpu_info().vmem_capacity_bytes)
    except Exception:
        return 64 << 20  # conservative default (v7x per-TC VMEM)


# --------------------------------------------------------------- kernels ---

def _mlc_kernel(x_ref, w_ref, b_ref, o_ref):
    """o = sigmoid(x @ w + b).  x:[tm,E]  w:[E,tn]  b:[1,tn]  o:[tm,tn]."""
    logits = jnp.dot(x_ref[...], w_ref[...],
                     preferred_element_type=jnp.float32) + b_ref[...]
    o_ref[...] = jax.nn.sigmoid(logits).astype(o_ref.dtype)


def _mlc_kernel_ktiled(x_ref, w_ref, b_ref, o_ref, acc_ref):
    """K-tiled variant: accumulate x@w over the k grid axis in f32 scratch,
    add bias + sigmoid only on the last k step."""
    k = pl.program_id(2)

    @pl.when(k == 0)
    def _():
        acc_ref[...] = jnp.zeros_like(acc_ref)

    acc_ref[...] += jnp.dot(x_ref[...], w_ref[...],
                            preferred_element_type=jnp.float32)

    @pl.when(k == pl.num_programs(2) - 1)
    def _():
        o_ref[...] = jax.nn.sigmoid(acc_ref[...] + b_ref[...]).astype(o_ref.dtype)


# --------------------------------------------------------------- factory ---

def make_multilabel_classifier(weight, bias, *, compute_dtype=jnp.float32,
                               tm=256, tn=256, tk_target=512,
                               _force_path=None):
    """weight: [C, E] (PyTorch nn.Linear layout), bias: [C].

    Returns a jitted callable  embeds:[B, E] -> sigmoid(embeds @ W.T + b):[B, C] f32.
    The weight transpose / cast / contraction padding happen once, here, so
    repeated calls pay zero per-call weight preparation cost."""
    C, E = weight.shape
    assert bias.shape == (C,)
    in_bytes = jnp.dtype(compute_dtype).itemsize

    cap = _vmem_capacity_bytes()
    budget = int(cap * 0.6)        # path-selection budget (double-buffer aware)
    vmem_limit = int(cap * 0.75)   # scoped VMEM limit handed to Mosaic

    w_t = weight.T.astype(compute_dtype)          # [E, C], once
    b2d = bias.astype(jnp.float32).reshape(1, C)  # [1, C], once

    tn_eff = min(tn, _round_up(C, 128))

    # Can the whole [E, C] weight stay VMEM-resident (fetched once per call)?
    resident_bytes = (2 * tm * E * in_bytes      # x tiles (double buffered)
                      + 2 * E * C * in_bytes     # weight (counted 2x, conservative)
                      + 2 * C * 4                # bias
                      + 2 * tm * C * 4)          # output tiles
    weight_resident_ok = resident_bytes <= budget

    k_tiled = (_force_path == "ktiled") or (
        _force_path is None and not weight_resident_ok)

    if k_tiled:
        nk = max(1, pl.cdiv(E, tk_target))
        tk = _round_up(pl.cdiv(E, nk), 128)      # lane-aligned contraction tile
        Ep = nk * tk
        # zero-pad the contraction dim ONCE for the weight
        w_prep = jnp.pad(w_t, ((0, Ep - E), (0, 0))) if Ep != E else w_t
    else:
        nk, tk, Ep = 1, E, E
        w_prep = w_t

    def _apply(embeds):
        B = embeds.shape[0]
        assert embeds.shape == (B, E)
        x = embeds.astype(compute_dtype)

        if k_tiled:
            # ---- Path C: 3-D (batch, classes, contraction) tiling ----------
            if Ep != E:
                x = jnp.pad(x, ((0, 0), (0, Ep - E)))
            tm_eff = min(tm, _round_up(B, 8))
            grid = (pl.cdiv(B, tm_eff), pl.cdiv(C, tn_eff), nk)
            return pl.pallas_call(
                _mlc_kernel_ktiled,
                out_shape=jax.ShapeDtypeStruct((B, C), jnp.float32),
                grid_spec=pltpu.PrefetchScalarGridSpec(
                    num_scalar_prefetch=0,
                    grid=grid,
                    in_specs=[
                        pl.BlockSpec((tm_eff, tk), lambda i, j, k: (i, k)),
                        pl.BlockSpec((tk, tn_eff), lambda i, j, k: (k, j)),
                        pl.BlockSpec((1, tn_eff), lambda i, j, k: (0, j)),
                    ],
                    out_specs=pl.BlockSpec((tm_eff, tn_eff),
                                           lambda i, j, k: (i, j)),
                    scratch_shapes=[pltpu.VMEM((tm_eff, tn_eff), jnp.float32)],
                ),
                compiler_params=pltpu.CompilerParams(
                    dimension_semantics=("parallel", "parallel", "arbitrary"),
                    vmem_limit_bytes=vmem_limit,
                ),
            )(x, w_prep, b2d)

        # Non-K-tiled: the weight is small enough to stay VMEM-resident.
        single_bytes = (B * E * in_bytes + E * C * in_bytes + C * 4 + B * C * 4)
        use_single = (_force_path == "single") or (
            _force_path is None and B <= tm and single_bytes <= budget)

        if use_single:
            # ---- Path A: single VMEM block, no grid (no pipeline prologue) -
            return pl.pallas_call(
                _mlc_kernel,
                out_shape=jax.ShapeDtypeStruct((B, C), jnp.float32),
                in_specs=[
                    pl.BlockSpec(memory_space=pltpu.MemorySpace.VMEM),
                    pl.BlockSpec(memory_space=pltpu.MemorySpace.VMEM),
                    pl.BlockSpec(memory_space=pltpu.MemorySpace.VMEM),
                ],
                out_specs=pl.BlockSpec(memory_space=pltpu.MemorySpace.VMEM),
                compiler_params=pltpu.CompilerParams(
                    vmem_limit_bytes=vmem_limit),
            )(x, w_prep, b2d)

        # ---- Path B: 1-D "parallel" grid over batch tiles ------------------
        # The constant index_map on the weight/bias means they are DMA'd from
        # HBM exactly once per call (not once per batch tile); the batch axis
        # stays "parallel" so v7x megacore can shard it across TensorCores.
        tm_eff = min(tm, _round_up(B, 8))
        grid = (pl.cdiv(B, tm_eff),)
        return pl.pallas_call(
            _mlc_kernel,
            out_shape=jax.ShapeDtypeStruct((B, C), jnp.float32),
            grid_spec=pltpu.PrefetchScalarGridSpec(
                num_scalar_prefetch=0,
                grid=grid,
                in_specs=[
                    pl.BlockSpec((tm_eff, E), lambda i: (i, 0)),
                    pl.BlockSpec((E, C), lambda i: (0, 0)),   # resident
                    pl.BlockSpec((1, C), lambda i: (0, 0)),   # resident
                ],
                out_specs=pl.BlockSpec((tm_eff, C), lambda i: (i, 0)),
            ),
            compiler_params=pltpu.CompilerParams(
                dimension_semantics=("parallel",),
                vmem_limit_bytes=vmem_limit,
            ),
        )(x, w_prep, b2d)

    return jax.jit(_apply)


def multilabel_classification_ref(embeds, weight, bias):
    return jax.nn.sigmoid(embeds @ weight.T + bias)


# ------------------------------------------------------------------ main ---

if __name__ == "__main__":
    key = jax.random.PRNGKey(0)
    keys = jax.random.split(key, 9)

    def make_params(kw, kb, emb, ncls):
        # Xavier-uniform weight (mirrors init_params); default Linear bias init.
        bw = math.sqrt(6.0 / (emb + ncls))
        w = jax.random.uniform(kw, (ncls, emb), jnp.float32, -bw, bw)
        bb = 1.0 / math.sqrt(emb)
        b = jax.random.uniform(kb, (ncls,), jnp.float32, -bb, bb)
        return w, b

    # --- 1) small case: gridless single-block path --------------------------
    B1, E1, C1 = 16, 32, 10
    x1 = jax.random.normal(keys[0], (B1, E1), jnp.float32)
    w1, b1 = make_params(keys[1], keys[2], E1, C1)
    clf1 = make_multilabel_classifier(w1, b1)
    out1 = jax.block_until_ready(clf1(x1))
    ref1 = multilabel_classification_ref(x1, w1, b1)
    assert out1.shape == (B1, C1)
    assert jnp.allclose(out1, ref1, atol=1e-5, rtol=1e-5)

    # --- 2) batch-tiled path (resident weight, ragged B/C, no padding) ------
    B2, E2, C2 = 300, 96, 200
    x2 = jax.random.normal(keys[3], (B2, E2), jnp.float32)
    w2, b2 = make_params(keys[4], keys[5], E2, C2)
    clf2 = make_multilabel_classifier(w2, b2)
    out2 = jax.block_until_ready(clf2(x2))
    ref2 = multilabel_classification_ref(x2, w2, b2)
    assert out2.shape == (B2, C2)
    assert jnp.allclose(out2, ref2, atol=5e-5, rtol=1e-4)

    # --- 3) K-tiled path (forced): accumulator scratch, padded contraction --
    B3, E3, C3 = 70, 400, 272
    x3 = jax.random.normal(keys[6], (B3, E3), jnp.float32)
    w3, b3 = make_params(keys[7], keys[8], E3, C3)
    clf3 = make_multilabel_classifier(w3, b3, tk_target=128, _force_path="ktiled")
    out3 = jax.block_until_ready(clf3(x3))
    ref3 = multilabel_classification_ref(x3, w3, b3)
    assert out3.shape == (B3, C3)
    assert jnp.allclose(out3, ref3, atol=5e-5, rtol=1e-4)

    # --- 4) optional bf16 compute dtype (f32 accumulate + epilogue) ---------
    clf_bf16 = make_multilabel_classifier(w2, b2, compute_dtype=jnp.bfloat16)
    out4 = jax.block_until_ready(clf_bf16(x2))
    assert out4.shape == (B2, C2)
    assert jnp.allclose(out4, ref2, atol=2e-2, rtol=2e-2)

    print("KERNEL_OK")
</pallas_src>

<mosaic_0001>
module attributes {stable_mosaic.version = 11 : i64} {
  func.func @_mlc_kernel(%arg0: memref<16x32xf32, #tpu.memory_space<vmem>>, %arg1: memref<32x10xf32, #tpu.memory_space<vmem>>, %arg2: memref<1x10xf32, #tpu.memory_space<vmem>>, %arg3: memref<16x10xf32, #tpu.memory_space<vmem>>) attributes {dimension_semantics = [], scalar_prefetch = 0 : i64, scratch_operands = 0 : i64, tpu.core_type = #tpu.core_type<tc>} {
    %c0 = arith.constant 0 : index
    %c0_0 = arith.constant 0 : index
    %0 = vector.load %arg0[%c0, %c0_0] : memref<16x32xf32, #tpu.memory_space<vmem>>, vector<16x32xf32>
    %c0_1 = arith.constant 0 : index
    %c0_2 = arith.constant 0 : index
    %1 = vector.load %arg1[%c0_1, %c0_2] : memref<32x10xf32, #tpu.memory_space<vmem>>, vector<32x10xf32>
    %cst = arith.constant dense<0.000000e+00> : vector<16x10xf32>
    %2 = tpu.matmul %0, %1, %cst {dimension_numbers = #tpu.dot_dimension_numbers<[1], [0], [0], [1], [0, 0, 1, 1], [], []>} : vector<16x32xf32>, vector<32x10xf32>, vector<16x10xf32> -> vector<16x10xf32>
    %c0_3 = arith.constant 0 : index
    %c0_4 = arith.constant 0 : index
    %3 = vector.load %arg2[%c0_3, %c0_4] : memref<1x10xf32, #tpu.memory_space<vmem>>, vector<1x10xf32>
    %4 = vector.broadcast %3 : vector<1x10xf32> to vector<16x10xf32>
    %5 = arith.addf %2, %4 : vector<16x10xf32>
    %6 = arith.negf %5 : vector<16x10xf32>
    %7 = math.exp %6 : vector<16x10xf32>
    %cst_5 = arith.constant 1.000000e+00 : f32
    %8 = vector.broadcast %cst_5 : f32 to vector<16x10xf32>
    %9 = arith.addf %8, %7 : vector<16x10xf32>
    %10 = arith.divf %8, %9 : vector<16x10xf32>
    %c0_6 = arith.constant 0 : index
    %c0_7 = arith.constant 0 : index
    %11 = vector.load %arg3[%c0_6, %c0_7] : memref<16x10xf32, #tpu.memory_space<vmem>>, vector<16x10xf32>
    tpu.vector_store %arg3[%c0_6, %c0_7], %10 {strides = array<i32>} : memref<16x10xf32, #tpu.memory_space<vmem>>, vector<16x10xf32>,
    return
  }
}

</mosaic_0001>

<llo_original>
// kernel: _apply.1
$region0: #{_apply.1}
  #allocation0 [shape = 'u32[]', space=smem, size = 0x4, offset = 0x4, fixed_abs, tag = 'smem constant byte address 0x4 - core index']
  #allocation1 [shape = 'u32[72,128]{1,0:T(1,128)}', space=vmem, size = 0x9000, scoped, tag = 'internal scratch']
  %s0 = inlined_call_operand.hbm [shape: f32[16,32], index: 0, kind: input, shape index: {}]
  %s1 = inlined_call_operand.hbm [shape: f32[32,10], index: 1, kind: input, shape index: {}]
  %s2 = inlined_call_operand.vmem [shape: f32[1,10], index: 2, kind: input, shape index: {}]
  %s3 = inlined_call_operand.hbm [shape: f32[16,10], index: 3, kind: output, shape index: {}]
  %s4 = sld [smem:[#allocation0]]
  $region30: #{_apply.1} parent=0
    _
  %s6 = ssub.s32 1, %s4
  %s7 = scalar_select 0, %s6, %s4
  $region1: #{_apply.1} parent=0
    #allocation2 [shape = 'u8[8192]{0}', space=vmem, size = 0x2000, scoped, tag = 'input window, operand 0, single buffered']
    #allocation3 [shape = 's32[1]{0}', space=sflag, size = 0x4, scoped, tag = 'scoped memory for _apply.1']
    #allocation4 [shape = 's32[1]{0}', space=sflag, size = 0x4, scoped, tag = 'scoped memory for _apply.1']
    #allocation5 [shape = 'u8[16384]{0}', space=vmem, size = 0x4000, scoped, tag = 'input window, operand 1, single buffered']
    #allocation6 [shape = 's32[1]{0}', space=sflag, size = 0x4, scoped, tag = 'scoped memory for _apply.1']
    #allocation7 [shape = 'u8[8192]{0}', space=vmem, size = 0x2000, scoped, tag = 'output window, operand 0, single buffered']
    %8 = vsyncpa [#allocation3], 0
    %9 = vsyncpa [#allocation6], 0
    %10 = vsyncpa [#allocation4], 0
    // Predicated region
    $region2: #{_apply.1} parent=1 // pred_check
      _
    $region3: #{_apply.1} parent=1 // pred_check_branch
      %12 = sbr.rel (0) target = $region5
    $region4: #{_apply.1} parent=1 // pred_region
      %14 = vsyncadd [#allocation3], 0
      %s15 = sshll.u32 %s0, 4
      %s16 = int_to_ptr.hbm [resolvable:$true] %s15
      %s17 = sshll.u32 [#allocation2], 4
      %s18 = int_to_ptr.vmem [resolvable:$true] %s17
      %23 = dma.hbm_to_vmem [thread:$0]  %s16, 256, %s18, [#allocation3], 128, 128, 8
    $region5: #{_apply.1} parent=1 // pred_fallthru
      _
    // Predicated region
    $region6: #{_apply.1} parent=1 // pred_check
      _
    $region7: #{_apply.1} parent=1 // pred_check_branch
      %25 = sbr.rel (0) target = $region9
    $region8: #{_apply.1} parent=1 // pred_region
      %27 = vsyncadd [#allocation6], 0
      %s28 = sshll.u32 %s1, 4
      %s29 = int_to_ptr.hbm [resolvable:$true] %s28
      %s30 = sshll.u32 [#allocation5], 4
      %s31 = int_to_ptr.vmem [resolvable:$true] %s30
      %36 = dma.hbm_to_vmem [thread:$0]  %s29, 512, %s31, [#allocation6], 128, 128, 8
    $region9: #{_apply.1} parent=1 // pred_fallthru
      _
    // Predicated region
    $region10: #{_apply.1} parent=1 // pred_check
      _
    $region11: #{_apply.1} parent=1 // pred_check_branch
      %38 = sbr.rel (0) target = $region13
    $region12: #{_apply.1} parent=1 // pred_region
      _
    $region13: #{_apply.1} parent=1 // pred_fallthru
      _
    // Predicated region
    $region14: #{_apply.1} parent=1 // pred_check
      _
    $region15: #{_apply.1} parent=1 // pred_check_branch
      %40 = sbr.rel (0) target = $region17
    $region16: #{_apply.1} parent=1 // pred_region
      %42 = dma.done [#allocation3], 256
    $region17: #{_apply.1} parent=1 // pred_fallthru
      _
    // Predicated region
    $region18: #{_apply.1} parent=1 // pred_check
      _
    $region19: #{_apply.1} parent=1 // pred_check_branch
      %44 = sbr.rel (0) target = $region21
    $region20: #{_apply.1} parent=1 // pred_region
      %46 = dma.done [#allocation6], 512
    $region21: #{_apply.1} parent=1 // pred_fallthru
      _
    %v47 = vld [vmem:[#allocation2] sm:$0xff]
    %v48 = vld [vmem:[#allocation2 + $0x8] sm:$0xff]
    %v49 = vld [vmem:[#allocation5] sm:$0xff]
    %v50 = vld [vmem:[#allocation5 + $0x8] sm:$0xff]
    %v51 = vld [vmem:[#allocation5 + $0x10] sm:$0xff]
    %v52 = vld [vmem:[#allocation5 + $0x18] sm:$0xff]
    %v53 = vld [vmem:[%s2] sm:$0x1]
    %v55 = vperm.slane %v53, 0
    %vm57 = vcmask 261120
    %v59 = vsel %vm57, %v47, 0
    %v62 = vsel %vm57, %v48, 0
    %64 = vmatpush.msra.mxu0 0.0
    %65 = vmatpush.msra.mxu0 0.0
    %66 = vmatpush.msra.mxu0 0.0
    %67 = vmatpush.msra.mxu0 0.0
    %68 = vmatpush.msra.mxu0 0.0
    %69 = vmatpush.msra.mxu0 0.0
    %70 = vmatpush.msra.mxu0 0.0
    %71 = vmatpush.msra.mxu0 0.0
    %72 = vmatpush.msra.mxu0 0.0
    %73 = vmatpush.msra.mxu0 0.0
    %74 = vmatpush.msra.mxu0 0.0
    %75 = vmatpush.msra.mxu0 0.0
    %76 = vmatpush.msra.mxu0 %v52
    %77 = vmatpush.msra.mxu0 %v51
    %78 = vmatpush.msra.mxu0 %v50
    %79 = vmatpush.msra.mxu0 %v49
    %80 = vmatmul.f32.gmra.mxu0 %v59
    %v81 = vpop.f32.mrf.mxu0
    %v82 = vadd.f32 %v55, %v81
    %83 = vmatmul.f32.gmra.mxu0 %v62
    %v84 = vpop.f32.mrf.mxu0
    %v85 = vadd.f32 %v55, %v84
    %86 = vdwg.mxu0
    %v87 = vxor.u32 %v82, 2147483648
    %v88 = vxor.u32 %v85, 2147483648
    %v89 = vmul.f32 %v87, 1.442695
    %v90 = vpow.pop %v89
    %v91 = vmul.f32 %v88, 1.442695
    %v92 = vpow.pop %v91
    %v93 = vadd.f32 %v90, 1.0
    %v94 = vadd.f32 %v92, 1.0
    %v95 = vrcp.pop %v93
    %v96 = vmul.f32 %v93, %v95
    %v97 = vsub.f32 1.0, %v96
    %v98 = vmul.f32 %v95, %v97
    %v99 = vadd.f32 %v95, %v98
    %vm100 = vweird.f32 %v93
    %vm101 = vweird.f32 %v95
    %vm102 = vmor %vm100, %vm101
    %v103 = vsel %vm102, %v95, %v99
    %v104 = vand.u32 2147483647, %v93
    %vm105 = vcmp.eq.f32.partialorder %v104, 8.507059e+37
    %v106 = vand.u32 %v93, 2147483648
    %v107 = vor.u32 1.1754944e-38, %v106
    %v108 = vsel %vm105, %v107, %v103
    %v109 = vmul.f32 1.0, %v108
    %v110 = vrcp.pop %v94
    %v111 = vmul.f32 %v94, %v110
    %v112 = vsub.f32 1.0, %v111
    %v113 = vmul.f32 %v110, %v112
    %v114 = vadd.f32 %v110, %v113
    %vm115 = vweird.f32 %v94
    %vm116 = vweird.f32 %v110
    %vm117 = vmor %vm115, %vm116
    %v118 = vsel %vm117, %v110, %v114
    %v119 = vand.u32 2147483647, %v94
    %vm120 = vcmp.eq.f32.partialorder %v119, 8.507059e+37
    %v121 = vand.u32 %v94, 2147483648
    %v122 = vor.u32 1.1754944e-38, %v121
    %v123 = vsel %vm120, %v122, %v118
    %v124 = vmul.f32 1.0, %v123
    %vm125 = vcmask 80896
    %126 = vst.msk [vmem:[#allocation7] sm:$0xff] %vm125, %v109
    %127 = vst.msk [vmem:[#allocation7 + $0x8] sm:$0xff] %vm125, %v124
    // Predicated region
    $region22: #{_apply.1} parent=1 // pred_check
      _
    $region23: #{_apply.1} parent=1 // pred_check_branch
      %129 = sbr.rel (0) target = $region25
    $region24: #{_apply.1} parent=1 // pred_region
      %131 = vsyncadd [#allocation4], 0
      %s132 = sshll.u32 [#allocation7], 4
      %s133 = int_to_ptr.vmem [resolvable:$true] %s132
      %s134 = sshll.u32 %s3, 4
      %s135 = int_to_ptr.hbm [resolvable:$true] %s134
      %140 = dma.vmem_to_hbm [thread:$0]  %s133, 256, %s135, [#allocation4], 128, 128, 8
    $region25: #{_apply.1} parent=1 // pred_fallthru
      _
    // Predicated region
    $region26: #{_apply.1} parent=1 // pred_check
      _
    $region27: #{_apply.1} parent=1 // pred_check_branch
      %142 = sbr.rel (0) target = $region29
    $region28: #{_apply.1} parent=1 // pred_region
      %144 = dma.done [#allocation4], 256
    $region29: #{_apply.1} parent=1 // pred_fallthru
      _
    %145 = vsyncpa [#allocation3], 1
    %146 = vsyncpa [#allocation6], 1
    %147 = vsyncpa [#allocation4], 1

</llo_original>
